<compile_context>
chip_gen: v7x
topology: tpu7x:2x2x1
jax: 0.10.0
libtpu: 0.0.40
codegen_flags: <defaults>
</compile_context>

<pallas_src>
import jax
import jax.numpy as jnp
from jax import lax
from jax.experimental import pallas as pl
from jax.experimental.pallas import tpu as pltpu


NEG_LARGE = -1e30                       # finite "-inf" (avoids inf - inf = nan)
VMEM_LIMIT_BYTES = 32 * 1024 * 1024     # explicit scoped-VMEM budget (headroom on v7x, > v5e default)


def _largest_divisor_tile(dim, target, granularity):
    """Largest multiple of `granularity` <= target that divides dim, else dim."""
    if dim <= target:
        return dim
    t = (target // granularity) * granularity
    while t >= granularity:
        if dim % t == 0:
            return t
        t -= granularity
    return dim


# ----------------------------------------------------------------------------
# Linear projection kernels:  out[tm, tn] = sum_k x[tm, tk] @ w[tk, tn] (+ b)
# Lane-dense output tiles, f32 MXU accumulation, weight tiled over N and K.
# ----------------------------------------------------------------------------
def _linear_bias_kernel(x_ref, w_ref, b_ref, o_ref, acc_ref):
    k = pl.program_id(2)

    @pl.when(k == 0)
    def _():
        acc_ref[...] = jnp.zeros_like(acc_ref)

    acc_ref[...] += jnp.dot(x_ref[...], w_ref[...],
                            preferred_element_type=jnp.float32)

    @pl.when(k == pl.num_programs(2) - 1)
    def _():
        o_ref[...] = (acc_ref[...]
                      + b_ref[...].astype(jnp.float32)).astype(o_ref.dtype)


def _linear_kernel(x_ref, w_ref, o_ref, acc_ref):
    k = pl.program_id(2)

    @pl.when(k == 0)
    def _():
        acc_ref[...] = jnp.zeros_like(acc_ref)

    acc_ref[...] += jnp.dot(x_ref[...], w_ref[...],
                            preferred_element_type=jnp.float32)

    @pl.when(k == pl.num_programs(2) - 1)
    def _():
        o_ref[...] = acc_ref[...].astype(o_ref.dtype)


def pallas_linear(x2d, w_t, bias=None, *, tile_m=512, tile_n=512, tile_k=512,
                  out_dtype=None):
    """x2d: (M, K), w_t: (K, N) pre-transposed (x @ W form), bias: (N,) or None."""
    M, K = x2d.shape
    K2, N = w_t.shape
    assert K == K2
    out_dtype = out_dtype if out_dtype is not None else x2d.dtype

    tm = min(tile_m, M)                                  # ragged M edge is safe
    tn = _largest_divisor_tile(N, tile_n, 128)           # lane-dense, divides N
    tk = _largest_divisor_tile(K, tile_k, 128)           # must divide K exactly
    assert K % tk == 0, "contraction tile must divide K"

    grid = (pl.cdiv(M, tm), pl.cdiv(N, tn), K // tk)

    in_specs = [
        pl.BlockSpec((tm, tk), lambda i, j, k: (i, k)),
        pl.BlockSpec((tk, tn), lambda i, j, k: (k, j)),
    ]
    args = [x2d, w_t]
    if bias is not None:
        in_specs.append(pl.BlockSpec((1, tn), lambda i, j, k: (0, j)))
        args.append(bias.reshape(1, N).astype(jnp.float32))
        kernel = _linear_bias_kernel
    else:
        kernel = _linear_kernel

    return pl.pallas_call(
        kernel,
        out_shape=jax.ShapeDtypeStruct((M, N), out_dtype),
        grid_spec=pltpu.PrefetchScalarGridSpec(
            num_scalar_prefetch=0,
            grid=grid,
            in_specs=in_specs,
            out_specs=pl.BlockSpec((tm, tn), lambda i, j, k: (i, j)),
            scratch_shapes=[pltpu.VMEM((tm, tn), jnp.float32)],
        ),
        compiler_params=pltpu.CompilerParams(
            dimension_semantics=("parallel", "parallel", "arbitrary"),
            vmem_limit_bytes=VMEM_LIMIT_BYTES),
    )(*args)


# ----------------------------------------------------------------------------
# Flash-style masked attention core (shared kernel body).
# Grid (B, H, q_tiles, kv_tiles); the kv axis carries the online-softmax state.
# Mask semantics match the PyTorch masked_softmax exactly:
#   attn = exp(s) * mask / sum(exp(s) * mask)
# Scale is already folded into q (via the qkv weight).
# ----------------------------------------------------------------------------
def _flash_kernel(q_ref, k_ref, v_ref, mask_ref, o_ref, m_sc, l_sc, acc_sc):
    kv = pl.program_id(3)

    @pl.when(kv == 0)
    def _():
        m_sc[...] = jnp.full_like(m_sc, NEG_LARGE)
        l_sc[...] = jnp.zeros_like(l_sc)
        acc_sc[...] = jnp.zeros_like(acc_sc)

    q = q_ref[...]                                  # (tq, hd) (pre-scaled)
    k = k_ref[...]                                  # (tkv, hd)
    v = v_ref[...]                                  # (tkv, hd)
    msk = mask_ref[...].astype(jnp.float32)         # (1, tkv) per-key mask

    # scores (tq, tkv): NT contraction over head_dim (Mosaic handles NT natively)
    s = lax.dot_general(q, k, (((1,), (1,)), ((), ())),
                        preferred_element_type=jnp.float32)

    # Apply the mask BEFORE the running max so a large masked score cannot
    # underflow every unmasked probability (finite sentinel keeps exp well
    # defined even for fully-masked tiles).
    s = jnp.where(msk > 0.0, s, NEG_LARGE)

    m_prev = m_sc[...]
    m_new = jnp.maximum(m_prev, jnp.max(s, axis=-1, keepdims=True))
    alpha = jnp.exp(m_prev - m_new)
    p = jnp.exp(s - m_new) * msk                    # exact zeros on masked keys
    l_sc[...] = alpha * l_sc[...] + jnp.sum(p, axis=-1, keepdims=True)
    acc_sc[...] = alpha * acc_sc[...] + jnp.dot(
        p.astype(v.dtype), v, preferred_element_type=jnp.float32)
    m_sc[...] = m_new

    @pl.when(kv == pl.num_programs(3) - 1)
    def _():
        inv_l = pl.reciprocal(l_sc[...], approx=True)   # EUP slot
        o_ref[...] = (acc_sc[...] * inv_l).astype(o_ref.dtype)


def _flash_call(in_specs, out_specs, out_shape, grid, args, tq, hd):
    return pl.pallas_call(
        _flash_kernel,
        out_shape=out_shape,
        grid_spec=pltpu.PrefetchScalarGridSpec(
            num_scalar_prefetch=0,
            grid=grid,
            in_specs=in_specs,
            out_specs=out_specs,
            scratch_shapes=[
                pltpu.VMEM((tq, 1), jnp.float32),    # running max
                pltpu.VMEM((tq, 1), jnp.float32),    # running denominator
                pltpu.VMEM((tq, hd), jnp.float32),   # running numerator
            ],
        ),
        compiler_params=pltpu.CompilerParams(
            dimension_semantics=("parallel", "parallel", "parallel",
                                 "arbitrary"),
            vmem_limit_bytes=VMEM_LIMIT_BYTES),
    )(*args)


def flash_attention_fused(qkv, mask, *, num_heads, tile_q=256, tile_kv=512,
                          out_dtype=None):
    """qkv: (B, N, 3C) with lane layout [3, H, hd]; mask: (B, N) key mask.

    Reads q/k/v per head straight from the fused activation and writes a
    head-concatenated (B, N, C) output.  Requires head_dim % 128 == 0.
    """
    B, N, C3 = qkv.shape
    C = C3 // 3
    H = num_heads
    hd = C // H
    assert hd % 128 == 0, "fused layout path needs lane-aligned head_dim"
    out_dtype = out_dtype if out_dtype is not None else qkv.dtype

    tq = _largest_divisor_tile(N, tile_q, 8)
    tkv = _largest_divisor_tile(N, tile_kv, 128)

    mask3 = mask.reshape(B, 1, N)
    grid = (B, H, N // tq, N // tkv)

    in_specs = [
        pl.BlockSpec((None, tq, hd), lambda b, h, qi, ki: (b, qi, h)),
        pl.BlockSpec((None, tkv, hd), lambda b, h, qi, ki: (b, ki, H + h)),
        pl.BlockSpec((None, tkv, hd), lambda b, h, qi, ki: (b, ki, 2 * H + h)),
        pl.BlockSpec((None, 1, tkv), lambda b, h, qi, ki: (b, 0, ki)),
    ]
    out_specs = pl.BlockSpec((None, tq, hd), lambda b, h, qi, ki: (b, qi, h))
    out_shape = jax.ShapeDtypeStruct((B, N, C), out_dtype)
    return _flash_call(in_specs, out_specs, out_shape, grid,
                       (qkv, qkv, qkv, mask3), tq, hd)


def flash_attention_heads(q, k, v, mask, *, tile_q=256, tile_kv=512,
                          out_dtype=None):
    """Fallback path: q, k, v: (B, H, N, head_dim); mask: (B, N)."""
    B, H, N, hd = q.shape
    out_dtype = out_dtype if out_dtype is not None else q.dtype

    tq = _largest_divisor_tile(N, tile_q, 8)
    tkv = _largest_divisor_tile(N, tile_kv, 128)

    mask3 = mask.reshape(B, 1, N)
    grid = (B, H, N // tq, N // tkv)

    in_specs = [
        pl.BlockSpec((None, None, tq, hd), lambda b, h, qi, ki: (b, h, qi, 0)),
        pl.BlockSpec((None, None, tkv, hd), lambda b, h, qi, ki: (b, h, ki, 0)),
        pl.BlockSpec((None, None, tkv, hd), lambda b, h, qi, ki: (b, h, ki, 0)),
        pl.BlockSpec((None, 1, tkv), lambda b, h, qi, ki: (b, 0, ki)),
    ]
    out_specs = pl.BlockSpec((None, None, tq, hd),
                             lambda b, h, qi, ki: (b, h, qi, 0))
    out_shape = jax.ShapeDtypeStruct((B, H, N, hd), out_dtype)
    return _flash_call(in_specs, out_specs, out_shape, grid,
                       (q, k, v, mask3), tq, hd)


# ----------------------------------------------------------------------------
# Full forward pass of the PyTorch Attention module.
# ----------------------------------------------------------------------------
def attention_pallas(x, mask, w_qkv, w_proj, b_proj, num_heads, *,
                     compute_dtype=None, qk_scale=None,
                     tile_q=256, tile_kv=512):
    """x: (B, N, C), mask: (B, N), w_qkv: (3C, C), w_proj: (C, C), b_proj: (C,).

    compute_dtype: dtype fed to the MXU (e.g. jnp.bfloat16 on v6e/v7x);
    accumulation is always f32.
    """
    B, N, C = x.shape
    H = num_heads
    assert C % H == 0
    hd = C // H
    scale = qk_scale if qk_scale is not None else hd ** (-0.5)
    cdt = compute_dtype if compute_dtype is not None else x.dtype

    # ---- parameter / layout plumbing (one-time, not the hot path) ----
    x2d = x.reshape(B * N, C).astype(cdt)
    # x @ W^T form; fold the attention scale into the q output columns so the
    # flash kernel never multiplies by `scale`.
    wqkv_t = jnp.transpose(w_qkv).astype(jnp.float32)            # (C, 3C)
    wqkv_t = wqkv_t.at[:, :C].multiply(scale).astype(cdt)
    wproj_t = jnp.transpose(w_proj).astype(cdt)                  # (C, C)

    # qkv projection (qkv_bias=False): one lane-dense tiled (M, C) x (C, 3C)
    qkv2d = pallas_linear(x2d, wqkv_t, out_dtype=cdt)            # (B*N, 3C)

    if hd % 128 == 0:
        # Fused layout: no wrapper-level HBM transposes; the flash kernel's
        # BlockSpecs pick q/k/v heads out of (B, N, 3C) and write (B, N, C).
        y2d = flash_attention_fused(
            qkv2d.reshape(B, N, 3 * C), mask, num_heads=H,
            tile_q=tile_q, tile_kv=tile_kv, out_dtype=cdt).reshape(B * N, C)
    else:
        # Tiny / non-lane-aligned head_dim: explicit per-head layout.
        qkv = qkv2d.reshape(B, N, 3, H, hd)
        qkv = jnp.transpose(qkv, (2, 0, 3, 1, 4))                # (3, B, H, N, hd)
        q, k, v = qkv[0], qkv[1], qkv[2]
        y = flash_attention_heads(q, k, v, mask, tile_q=tile_q,
                                  tile_kv=tile_kv, out_dtype=cdt)
        y2d = jnp.transpose(y, (0, 2, 1, 3)).reshape(B * N, C)

    # attn_drop = Dropout(0.0) -> identity; output projection; proj_drop -> identity
    out2d = pallas_linear(y2d, wproj_t, b_proj, out_dtype=x.dtype)
    return out2d.reshape(B, N, C)


def attention_reference(x, mask, w_qkv, w_proj, b_proj, num_heads):
    """Pure-JAX reference mirroring the PyTorch forward."""
    B, N, C = x.shape
    head_dim = C // num_heads
    scale = head_dim ** (-0.5)

    qkv = x @ w_qkv.T                                      # (B, N, 3C)
    qkv = qkv.reshape(B, N, 3, num_heads, head_dim)
    qkv = jnp.transpose(qkv, (2, 0, 3, 1, 4))              # (3, B, H, N, hd)
    q, k, v = qkv[0], qkv[1], qkv[2]

    attn = jnp.einsum('bhnd,bhmd->bhnm', q, k) * scale     # (B, H, N, N)
    m = mask[:, None, None, :]                             # (B, 1, 1, N)
    x_exp = jnp.exp(attn) * m
    attn = x_exp / jnp.sum(x_exp, axis=-1, keepdims=True)

    y = jnp.einsum('bhnm,bhmd->bhnd', attn, v)             # (B, H, N, hd)
    y = jnp.transpose(y, (0, 2, 1, 3)).reshape(B, N, C)
    return y @ w_proj.T + b_proj


if __name__ == "__main__":
    def make_case(B, N, C, key):
        kx, kw1, kw2, kb, km = jax.random.split(key, 5)
        x = jax.random.normal(kx, (B, N, C), dtype=jnp.float32)
        # key mask with some zeros; guarantee at least one valid key per row
        mask = (jax.random.uniform(km, (B, N)) > 0.3).astype(jnp.float32)
        mask = mask.at[:, 0].set(1.0)
        w_qkv = 0.02 * jax.random.normal(kw1, (3 * C, C), dtype=jnp.float32)
        w_proj = 0.02 * jax.random.normal(kw2, (C, C), dtype=jnp.float32)
        b_proj = 0.01 * jax.random.normal(kb, (C,), dtype=jnp.float32)
        return x, mask, w_qkv, w_proj, b_proj

    key = jax.random.PRNGKey(0)
    k1, k2 = jax.random.split(key)

    # --- Case 1: module-default tiny shapes (hd = 4 -> per-head fallback path)
    B, N, C, H = 2, 8, 32, 8
    x, mask, w_qkv, w_proj, b_proj = make_case(B, N, C, k1)
    ref = attention_reference(x, mask, w_qkv, w_proj, b_proj, H)
    out = jax.block_until_ready(
        attention_pallas(x, mask, w_qkv, w_proj, b_proj, H))
    assert out.shape == (B, N, C)
    assert jnp.allclose(out, ref, atol=2e-3, rtol=2e-3), (
        f"case1 f32 max abs err {jnp.max(jnp.abs(out - ref))}")

    # --- Case 2: lane-aligned heads (hd = 128 -> fused layout, no wrapper
    # transposes), f32 and bf16 MXU operands.
    B, N, C, H = 2, 256, 256, 2
    x, mask, w_qkv, w_proj, b_proj = make_case(B, N, C, k2)
    ref = attention_reference(x, mask, w_qkv, w_proj, b_proj, H)

    out = jax.block_until_ready(
        attention_pallas(x, mask, w_qkv, w_proj, b_proj, H))
    assert out.shape == (B, N, C)
    assert jnp.allclose(out, ref, atol=2e-3, rtol=2e-3), (
        f"case2 f32 max abs err {jnp.max(jnp.abs(out - ref))}")

    # Same case with small flash tiles -> multiple kv tiles, exercising the
    # online masked-softmax accumulation across the arbitrary grid axis.
    out_small = jax.block_until_ready(
        attention_pallas(x, mask, w_qkv, w_proj, b_proj, H,
                         tile_q=128, tile_kv=128))
    assert jnp.allclose(out_small, ref, atol=2e-3, rtol=2e-3), (
        f"case2 small-tile max abs err {jnp.max(jnp.abs(out_small - ref))}")

    # bf16 MXU operands with f32 accumulation (fast path on v6e / v7x).
    out_bf16 = attention_pallas(x, mask, w_qkv, w_proj, b_proj, H,
                                compute_dtype=jnp.bfloat16)
    out_bf16 = jax.block_until_ready(out_bf16).astype(jnp.float32)
    assert jnp.allclose(out_bf16, ref, atol=5e-2, rtol=5e-2), (
        f"case2 bf16 max abs err {jnp.max(jnp.abs(out_bf16 - ref))}")

    print("KERNEL_OK")
</pallas_src>

<mosaic_0001>
module attributes {stable_mosaic.version = 11 : i64} {
  func.func @_linear_kernel(%arg0: i32, %arg1: i32, %arg2: i32, %arg3: memref<16x32xf32, #tpu.memory_space<vmem>>, %arg4: memref<32x96xf32, #tpu.memory_space<vmem>>, %arg5: memref<16x96xf32, #tpu.memory_space<vmem>>, %arg6: memref<16x96xf32, #tpu.memory_space<vmem>>) attributes {dimension_semantics = [#tpu.dimension_semantics<parallel>, #tpu.dimension_semantics<parallel>, #tpu.dimension_semantics<arbitrary>], iteration_bounds = array<i64: 1, 1, 1>, scalar_prefetch = 0 : i64, scratch_operands = 1 : i64, tpu.core_type = #tpu.core_type<tc>, window_params = [{transform_indices = @transform_0, window_bounds = array<i64: 16, 32>}, {transform_indices = @transform_1, window_bounds = array<i64: 32, 96>}, {transform_indices = @transform_2, window_bounds = array<i64: 16, 96>}]} {
    %c0_i32 = arith.constant 0 : i32
    %0 = arith.cmpi eq, %arg2, %c0_i32 : i32
    %1 = arith.extui %0 : i1 to i32
    %c0_i32_0 = arith.constant 0 : i32
    %2 = arith.cmpi ne, %1, %c0_i32_0 : i32
    scf.if %2 {
      %cst_10 = arith.constant 0.000000e+00 : f32
      %12 = vector.broadcast %cst_10 : f32 to vector<16x96xf32>
      %c0_11 = arith.constant 0 : index
      %c0_12 = arith.constant 0 : index
      %13 = vector.load %arg6[%c0_11, %c0_12] : memref<16x96xf32, #tpu.memory_space<vmem>>, vector<16x96xf32>
      tpu.vector_store %arg6[%c0_11, %c0_12], %12 {strides = array<i32>} : memref<16x96xf32, #tpu.memory_space<vmem>>, vector<16x96xf32>,
    } else {
    }
    %c0 = arith.constant 0 : index
    %c0_1 = arith.constant 0 : index
    %3 = vector.load %arg6[%c0, %c0_1] : memref<16x96xf32, #tpu.memory_space<vmem>>, vector<16x96xf32>
    %c0_2 = arith.constant 0 : index
    %c0_3 = arith.constant 0 : index
    %4 = vector.load %arg3[%c0_2, %c0_3] : memref<16x32xf32, #tpu.memory_space<vmem>>, vector<16x32xf32>
    %c0_4 = arith.constant 0 : index
    %c0_5 = arith.constant 0 : index
    %5 = vector.load %arg4[%c0_4, %c0_5] : memref<32x96xf32, #tpu.memory_space<vmem>>, vector<32x96xf32>
    %cst = arith.constant dense<0.000000e+00> : vector<16x96xf32>
    %6 = tpu.matmul %4, %5, %cst {dimension_numbers = #tpu.dot_dimension_numbers<[1], [0], [0], [1], [0, 0, 1, 1], [], []>} : vector<16x32xf32>, vector<32x96xf32>, vector<16x96xf32> -> vector<16x96xf32>
    %7 = arith.addf %3, %6 : vector<16x96xf32>
    %c0_6 = arith.constant 0 : index
    %c0_7 = arith.constant 0 : index
    %8 = vector.load %arg6[%c0_6, %c0_7] : memref<16x96xf32, #tpu.memory_space<vmem>>, vector<16x96xf32>
    tpu.vector_store %arg6[%c0_6, %c0_7], %7 {strides = array<i32>} : memref<16x96xf32, #tpu.memory_space<vmem>>, vector<16x96xf32>,
    %c0_i32_8 = arith.constant 0 : i32
    %9 = arith.cmpi eq, %arg2, %c0_i32_8 : i32
    %10 = arith.extui %9 : i1 to i32
    %c0_i32_9 = arith.constant 0 : i32
    %11 = arith.cmpi ne, %10, %c0_i32_9 : i32
    scf.if %11 {
      %c0_10 = arith.constant 0 : index
      %c0_11 = arith.constant 0 : index
      %12 = vector.load %arg6[%c0_10, %c0_11] : memref<16x96xf32, #tpu.memory_space<vmem>>, vector<16x96xf32>
      %c0_12 = arith.constant 0 : index
      %c0_13 = arith.constant 0 : index
      %13 = vector.load %arg5[%c0_12, %c0_13] : memref<16x96xf32, #tpu.memory_space<vmem>>, vector<16x96xf32>
      tpu.vector_store %arg5[%c0_12, %c0_13], %12 {strides = array<i32>} : memref<16x96xf32, #tpu.memory_space<vmem>>, vector<16x96xf32>,
    } else {
    }
    return
  }
  func.func @transform_0(%arg0: i32, %arg1: i32, %arg2: i32) -> (i32, i32) {
    %c0_i32 = arith.constant 0 : i32
    return %arg0, %arg2 : i32, i32
  }
  func.func @transform_1(%arg0: i32, %arg1: i32, %arg2: i32) -> (i32, i32) {
    %c0_i32 = arith.constant 0 : i32
    return %arg2, %arg1 : i32, i32
  }
  func.func @transform_2(%arg0: i32, %arg1: i32, %arg2: i32) -> (i32, i32) {
    %c0_i32 = arith.constant 0 : i32
    return %arg0, %arg1 : i32, i32
  }
}

</mosaic_0001>

<llo_original>
// kernel: tpu_custom_call.1
$region0: #{tpu_custom_call.1}
  #allocation0 [shape = 'u32[]', space=smem, size = 0x4, offset = 0x4, fixed_abs, tag = 'smem constant byte address 0x4 - core index']
  #allocation1 [shape = 'u32[144,128]{1,0:T(1,128)}', space=vmem, size = 0x12000, scoped, tag = 'internal scratch']
  #allocation2 [shape = 'f32[16,96]{1,0:T(8,128)}', space=vmem, size = 0x2000, scoped, tag = 'scratch operand']
  %s0 = inlined_call_operand.hbm [shape: f32[16,32], index: 0, kind: input, shape index: {}]
  %s1 = inlined_call_operand.hbm [shape: f32[32,96], index: 1, kind: input, shape index: {}]
  %s2 = inlined_call_operand.hbm [shape: f32[16,96], index: 2, kind: output, shape index: {}]
  %s3 = sld [smem:[#allocation0]]
  $region34: #{tpu_custom_call.1} parent=0
    _
  %s5 = ssub.s32 1, %s3
  %s6 = scalar_select 0, %s5, %s3
  $region1: #{tpu_custom_call.1} parent=0
    #allocation3 [shape = 'u8[8192]{0}', space=vmem, size = 0x2000, scoped, tag = 'input window, operand 0, single buffered']
    #allocation4 [shape = 's32[1]{0}', space=sflag, size = 0x4, scoped, tag = 'scoped memory for tpu_custom_call.1']
    #allocation5 [shape = 's32[1]{0}', space=sflag, size = 0x4, scoped, tag = 'scoped memory for tpu_custom_call.1']
    #allocation6 [shape = 'u8[16384]{0}', space=vmem, size = 0x4000, scoped, tag = 'input window, operand 1, single buffered']
    #allocation7 [shape = 's32[1]{0}', space=sflag, size = 0x4, scoped, tag = 'scoped memory for tpu_custom_call.1']
    #allocation8 [shape = 'u8[8192]{0}', space=vmem, size = 0x2000, scoped, tag = 'output window, operand 0, single buffered']
    %7 = vsyncpa [#allocation4], 0
    %8 = vsyncpa [#allocation7], 0
    %9 = vsyncpa [#allocation5], 0
    // Predicated region
    $region2: #{tpu_custom_call.1} parent=1 // pred_check
      _
    $region3: #{tpu_custom_call.1} parent=1 // pred_check_branch
      %11 = sbr.rel (0) target = $region5
    $region4: #{tpu_custom_call.1} parent=1 // pred_region
      %s13 = ssub.s32 256, 256
      %14 = vsyncadd [#allocation4], %s13
      %s15 = sshll.u32 [#allocation3], 4
      %s16 = int_to_ptr.vmem [resolvable:$true] %s15
      %21 = dma.hbm_to_vmem [thread:$0]  %s0, 256, %s16, [#allocation4], 128, 128, 8
    $region5: #{tpu_custom_call.1} parent=1 // pred_fallthru
      _
    // Predicated region
    $region6: #{tpu_custom_call.1} parent=1 // pred_check
      _
    $region7: #{tpu_custom_call.1} parent=1 // pred_check_branch
      %23 = sbr.rel (0) target = $region9
    $region8: #{tpu_custom_call.1} parent=1 // pred_region
      %s25 = ssub.s32 512, 512
      %26 = vsyncadd [#allocation7], %s25
      %s27 = sshll.u32 [#allocation6], 4
      %s28 = int_to_ptr.vmem [resolvable:$true] %s27
      %33 = dma.hbm_to_vmem [thread:$0]  %s1, 512, %s28, [#allocation7], 128, 128, 8
    $region9: #{tpu_custom_call.1} parent=1 // pred_fallthru
      _
    // Predicated region
    $region10: #{tpu_custom_call.1} parent=1 // pred_check
      _
    $region11: #{tpu_custom_call.1} parent=1 // pred_check_branch
      %35 = sbr.rel (0) target = $region13
    $region12: #{tpu_custom_call.1} parent=1 // pred_region
      %36 = dma.done [#allocation4], 256
    $region13: #{tpu_custom_call.1} parent=1 // pred_fallthru
      _
    // Predicated region
    $region14: #{tpu_custom_call.1} parent=1 // pred_check
      _
    $region15: #{tpu_custom_call.1} parent=1 // pred_check_branch
      %38 = sbr.rel (0) target = $region17
    $region16: #{tpu_custom_call.1} parent=1 // pred_region
      %39 = dma.done [#allocation7], 512
    $region17: #{tpu_custom_call.1} parent=1 // pred_fallthru
      _
    %p40 = scmp.eq.s32.totalorder 0, 0
    // Predicated region
    $region18: #{tpu_custom_call.1} parent=1 // pred_check
      %p41 = pneg %p40
    $region19: #{tpu_custom_call.1} parent=1 // pred_check_branch
      %43 = sbr.rel (%p41) target = $region21
    $region20: #{tpu_custom_call.1} parent=1 // pred_region
      %vm44 = vcmask 785408
      %45 = vst.msk [vmem:[#allocation2] sm:$0xff] %vm44, 0.0
      %46 = vst.msk [vmem:[#allocation2 + $0x8] sm:$0xff] %vm44, 0.0
    $region21: #{tpu_custom_call.1} parent=1 // pred_fallthru
      _
    %v47 = vld [vmem:[#allocation2] sm:$0xff]
    %v48 = vld [vmem:[#allocation2 + $0x8] sm:$0xff]
    %v49 = vld [vmem:[#allocation3] sm:$0xff]
    %v50 = vld [vmem:[#allocation3 + $0x8] sm:$0xff]
    %v51 = vld [vmem:[#allocation6] sm:$0xff]
    %v52 = vld [vmem:[#allocation6 + $0x8] sm:$0xff]
    %v53 = vld [vmem:[#allocation6 + $0x10] sm:$0xff]
    %v54 = vld [vmem:[#allocation6 + $0x18] sm:$0xff]
    %vm55 = vcmask 261120
    %v57 = vsel %vm55, %v49, 0
    %v60 = vsel %vm55, %v50, 0
    %62 = vmatprep.subr.mxu0 0.0
    %63 = vmatpush1.msra.mxu0 %v51
    %64 = vmatprep.subr.mxu0 0.0
    %65 = vmatpush1.msra.mxu0 %v52
    %66 = vmatprep.subr.mxu0 0.0
    %67 = vmatpush1.msra.mxu0 %v53
    %68 = vmatprep.subr.mxu0 0.0
    %69 = vmatpush1.msra.mxu0 %v54
    %70 = vmatprep.subr.mxu0 0.0
    %71 = vmatpush1.msra.mxu0 0.0
    %72 = vmatprep.subr.mxu0 0.0
    %73 = vmatpush1.msra.mxu0 0.0
    %74 = vmatprep.subr.mxu0 0.0
    %75 = vmatpush1.msra.mxu0 0.0
    %76 = vmatprep.subr.mxu0 0.0
    %77 = vmatpush1.msra.mxu0 0.0
    %78 = vmatprep.subr.mxu0 0.0
    %79 = vmatpush1.msra.mxu0 0.0
    %80 = vmatprep.subr.mxu0 0.0
    %81 = vmatpush1.msra.mxu0 0.0
    %82 = vmatprep.subr.mxu0 0.0
    %83 = vmatpush1.msra.mxu0 0.0
    %84 = vmatprep.subr.mxu0 0.0
    %85 = vmatpush1.msra.mxu0 0.0
    %86 = vmatprep.subr.mxu0 0.0
    %87 = vmatpush1.msra.mxu0 0.0
    %88 = vmatprep.subr.mxu0 0.0
    %89 = vmatpush1.msra.mxu0 0.0
    %90 = vmatprep.subr.mxu0 0.0
    %91 = vmatpush1.msra.mxu0 0.0
    %92 = vmatprep.subr.mxu0 0.0
    %93 = vmatpush1.msra.mxu0 0.0
    %94 = vmatprep.subr.mxu0 0.0
    %95 = vmatpush1.msra.mxu0 0.0
    %96 = vmatprep.subr.mxu0 0.0
    %97 = vmatpush1.msra.mxu0 0.0
    %98 = vmatprep.subr.mxu0 0.0
    %99 = vmatpush1.msra.mxu0 0.0
    %100 = vmatprep.subr.mxu0 0.0
    %101 = vmatpush1.msra.mxu0 0.0
    %102 = vmatprep.subr.mxu0 0.0
    %103 = vmatpush1.msra.mxu0 0.0
    %104 = vmatprep.subr.mxu0 0.0
    %105 = vmatpush1.msra.mxu0 0.0
    %106 = vmatprep.subr.mxu0 0.0
    %107 = vmatpush1.msra.mxu0 0.0
    %108 = vmatprep.subr.mxu0 0.0
    %109 = vmatpush1.msra.mxu0 0.0
    %110 = vmatprep.subr.mxu0 0.0
    %111 = vmatpush1.msra.mxu0 0.0
    %112 = vmatprep.subr.mxu0 0.0
    %113 = vmatpush1.msra.mxu0 0.0
    %114 = vmatprep.subr.mxu0 0.0
    %115 = vmatpush1.msra.mxu0 0.0
    %116 = vmatprep.subr.mxu0 0.0
    %117 = vmatpush1.msra.mxu0 0.0
    %118 = vmatprep.subr.mxu0 0.0
    %119 = vmatpush1.msra.mxu0 0.0
    %120 = vmatprep.subr.mxu0 0.0
    %121 = vmatpush1.msra.mxu0 0.0
    %122 = vmatprep.subr.mxu0 0.0
    %123 = vmatpush1.msra.mxu0 0.0
    %124 = vmatprep.subr.mxu0 0.0
    %125 = vmatpush1.msra.mxu0 0.0
    %126 = vmatprep.mubr.f32.mxu0 0.0
    %127 = vmatmul.mubr.f32.gmra.mrb[0].mxu0 %v57
    %v128 = vpop.f32.mrb[0].mxu0
    %v129 = vadd.f32 0.0, %v128
    %v130 = vpop.f32.mrb[0].mxu0
    %131 = vmatprep.mubr.f32.mxu0 0.0
    %132 = vmatmul.mubr.f32.gmra.mrb[0].mxu0 %v60
    %v133 = vpop.f32.mrb[0].mxu0
    %v134 = vadd.f32 0.0, %v133
    %v135 = vpop.f32.mrb[0].mxu0
    %136 = vdwg.mxu0
    %v137 = vadd.f32 %v47, %v129
    %v138 = vadd.f32 %v48, %v134
    %vm139 = vcmask 785408
    %140 = vst.msk [vmem:[#allocation2] sm:$0xff] %vm139, %v137
    %141 = vst.msk [vmem:[#allocation2 + $0x8] sm:$0xff] %vm139, %v138
    // Predicated region
    $region22: #{tpu_custom_call.1} parent=1 // pred_check
      %p142 = pneg %p40
    $region23: #{tpu_custom_call.1} parent=1 // pred_check_branch
      %144 = sbr.rel (%p142) target = $region25
    $region24: #{tpu_custom_call.1} parent=1 // pred_region
      %v145 = vld [vmem:[#allocation2] sm:$0xff]
      %v146 = vld [vmem:[#allocation2 + $0x8] sm:$0xff]
      %147 = vst.msk [vmem:[#allocation8] sm:$0xff] %vm139, %v145
      %148 = vst.msk [vmem:[#allocation8 + $0x8] sm:$0xff] %vm139, %v146
    $region25: #{tpu_custom_call.1} parent=1 // pred_fallthru
      _
    // Predicated region
    $region26: #{tpu_custom_call.1} parent=1 // pred_check
      _
    $region27: #{tpu_custom_call.1} parent=1 // pred_check_branch
      %150 = sbr.rel (0) target = $region29
    $region28: #{tpu_custom_call.1} parent=1 // pred_region
      %s152 = ssub.s32 256, 256
      %153 = vsyncadd [#allocation5], %s152
      %s154 = sshll.u32 [#allocation8], 4
      %s155 = int_to_ptr.vmem [resolvable:$true] %s154
      %160 = dma.vmem_to_hbm [thread:$0]  %s155, 256, %s2, [#allocation5], 128, 128, 8
    $region29: #{tpu_custom_call.1} parent=1 // pred_fallthru
      _
    // Predicated region
    $region30: #{tpu_custom_call.1} parent=1 // pred_check
      _
    $region31: #{tpu_custom_call.1} parent=1 // pred_check_branch
      %162 = sbr.rel (0) target = $region33
    $region32: #{tpu_custom_call.1} parent=1 // pred_region
      %163 = dma.done [#allocation5], 256
    $region33: #{tpu_custom_call.1} parent=1 // pred_fallthru
      _
    %164 = vsyncpa [#allocation4], 1
    %165 = vsyncpa [#allocation7], 1
    %166 = vsyncpa [#allocation5], 1

</llo_original>
